<compile_context>
chip_gen: v5e
topology: v5e:2x2
jax: 0.10.0
libtpu: 0.0.40
codegen_flags: <defaults>
</compile_context>

<pallas_src>
import functools

import jax
import jax.numpy as jnp
from jax.experimental import pallas as pl
from jax.experimental.pallas import tpu as pltpu

_LANE_CANDIDATES = (4096, 2048, 1024, 512, 256, 128)


def _hswish_kernel(x_ref, o_ref):
    # f32 internal math: VPU work is hidden under the HBM stream, and this
    # avoids rounding the 1/6 constant to bf16 before the multiply.
    xf = x_ref[...].astype(jnp.float32)
    r6 = jnp.clip(xf + 3.0, 0.0, 6.0)              # relu6(x + 3)
    o_ref[...] = (xf * r6 * (1.0 / 6.0)).astype(o_ref.dtype)


def _hswish_jnp(x):
    """Reference / tail-path formula (same numerics as the kernel)."""
    xf = x.astype(jnp.float32)
    return (xf * jnp.clip(xf + 3.0, 0.0, 6.0) * (1.0 / 6.0)).astype(x.dtype)


@functools.lru_cache(maxsize=1)
def _tpu_block_config():
    """Returns (block_bytes_f32_equiv, vmem_limit_bytes_or_None, min_grid_steps)."""
    try:
        kind = jax.devices()[0].device_kind.lower()
    except Exception:
        kind = ""
    if "v7" in kind:
        # v7x: 2 TCs, ~3.2 TB/s HBM -> bigger blocks (4 buffers = 16 MiB),
        # raised scoped-VMEM cap (default 32 of 64 MiB), >=4 grid steps so
        # both cores pipeline (prefetch i+1 / writeback i-1 overlaps).
        return 4 * 1024 * 1024, 48 * 1024 * 1024, 4
    # v5e/v6e: single TC, 2 MiB blocks are already near the HBM roofline and
    # the 8 MiB of double-buffers stay well under v5e's 16 MiB default limit.
    return 2 * 1024 * 1024, None, 1


def _pick_row_tile(n_rows, lanes, itemsize, block_bytes, min_steps):
    # Sublane packing: 8 rows/vreg for 4-byte dtypes, 16 for 2-byte, 32 for
    # 1-byte.  Unaligned tiles on narrow dtypes force masked vst.msk stores.
    sub = max(8, 32 // max(1, itemsize))
    if n_rows <= sub:
        return n_rows                               # full-extent block (legal)

    # Size blocks by their f32 footprint: the elementwise chain is computed in
    # f32, so VMEM intermediates scale with the f32 size, not the I/O size.
    eff = max(4, itemsize)
    target = max(sub, (block_bytes // (lanes * eff)) // sub * sub)

    # On v7x, guarantee >= min_steps grid steps when there is enough work so
    # both TensorCores get >= 2 steps each.
    if min_steps > 1:
        cap = (n_rows // min_steps) // sub * sub
        if cap >= sub:
            target = min(target, cap)
        else:
            half = (n_rows // 2) // sub * sub
            if half >= sub:
                target = min(target, half)
    target = max(sub, target)

    # Prefer a tile that divides n_rows exactly (no masked partial edge block,
    # no load-imbalance step) if one exists within [target/2, target].
    lo = max(sub, (target // 2) // sub * sub)
    t = target
    while t >= lo:
        if n_rows % t == 0:
            return t
        t -= sub
    return target


def _hswish_2d(x_flat, n_rows, lanes):
    dtype = x_flat.dtype
    itemsize = dtype.itemsize
    block_bytes, vmem_limit, min_steps = _tpu_block_config()
    row_tile = _pick_row_tile(n_rows, lanes, itemsize, block_bytes, min_steps)
    n_elems = n_rows * lanes
    return pl.pallas_call(
        _hswish_kernel,
        out_shape=jax.ShapeDtypeStruct((n_rows, lanes), dtype),
        grid=(pl.cdiv(n_rows, row_tile),),
        in_specs=[pl.BlockSpec((row_tile, lanes), lambda i: (i, 0))],
        out_specs=pl.BlockSpec((row_tile, lanes), lambda i: (i, 0)),
        cost_estimate=pl.CostEstimate(
            flops=5 * n_elems,
            transcendentals=0,
            bytes_accessed=2 * n_elems * itemsize,
        ),
        compiler_params=pltpu.CompilerParams(
            dimension_semantics=("parallel",),
            vmem_limit_bytes=vmem_limit,
        ),
    )(x_flat.reshape(n_rows, lanes))


def hswish(x: jax.Array) -> jax.Array:
    """Elementwise hard-swish matching the PyTorch `_Hswish` forward."""
    orig_shape = x.shape
    n = x.size
    if n == 0:
        return x

    # Widest lane width (multiple of 128) that divides the element count:
    # lane-dense unmasked stores, no padding, free reshapes only.
    lanes = None
    for cand in _LANE_CANDIDATES:
        if n % cand == 0:
            lanes = cand
            break

    x_flat = x.reshape(-1)

    if lanes is not None:
        return _hswish_2d(x_flat, n // lanes, lanes).reshape(orig_shape)

    # Rare path: element count is not a multiple of 128.  Kernel handles the
    # 128-aligned prefix; the (<128-element) tail is one fused VPU expression.
    # This replaces the old full-width jnp.pad + full-tensor slice (2 extra
    # passes) with a single concatenate.
    n_main = (n // 128) * 128
    if n_main == 0:
        # Tiny tensor (< 128 elements): a single fused XLA elementwise pass.
        return _hswish_jnp(x)
    main = _hswish_2d(x_flat[:n_main], n_main // 128, 128)
    tail = _hswish_jnp(x_flat[n_main:])
    return jnp.concatenate([main.reshape(-1), tail]).reshape(orig_shape)


if __name__ == "__main__":
    key = jax.random.PRNGKey(0)
    k1, k2, k3 = jax.random.split(key, 3)

    # f32 NCHW activation (aligned path), consistent with MobileNetV3 usage.
    x32 = jax.random.normal(k1, (2, 4, 16, 16), dtype=jnp.float32) * 4.0
    out32 = hswish(x32)
    jax.block_until_ready(out32)
    assert out32.shape == x32.shape and out32.dtype == x32.dtype
    assert jnp.allclose(out32, _hswish_jnp(x32), atol=1e-6, rtol=1e-6)

    # bf16 path (narrow-dtype sublane packing, f32 internal math).
    xbf = (jax.random.normal(k2, (2, 4, 16, 16), dtype=jnp.float32) * 4.0
           ).astype(jnp.bfloat16)
    outbf = hswish(xbf)
    jax.block_until_ready(outbf)
    assert outbf.shape == xbf.shape and outbf.dtype == jnp.bfloat16
    assert jnp.allclose(outbf.astype(jnp.float32),
                        _hswish_jnp(xbf).astype(jnp.float32),
                        atol=1e-2, rtol=1e-2)

    # Misaligned element count (2*3*7*7 = 294): exercises prefix + tail path.
    xodd = jax.random.normal(k3, (2, 3, 7, 7), dtype=jnp.float32) * 4.0
    outodd = hswish(xodd)
    jax.block_until_ready(outodd)
    assert outodd.shape == xodd.shape and outodd.dtype == xodd.dtype
    assert jnp.allclose(outodd, _hswish_jnp(xodd), atol=1e-6, rtol=1e-6)

    print("KERNEL_OK")
</pallas_src>

<mosaic_0001>
module attributes {stable_mosaic.version = 11 : i64} {
  func.func @_hswish_kernel(%arg0: i32, %arg1: memref<1x2048xf32, #tpu.memory_space<vmem>>, %arg2: memref<1x2048xf32, #tpu.memory_space<vmem>>) attributes {dimension_semantics = [#tpu.dimension_semantics<parallel>], iteration_bounds = array<i64: 1>, scalar_prefetch = 0 : i64, scratch_operands = 0 : i64, tpu.core_type = #tpu.core_type<tc>, window_params = [{transform_indices = @transform_0, window_bounds = array<i64: 1, 2048>}, {transform_indices = @transform_1, window_bounds = array<i64: 1, 2048>}]} {
    %c0 = arith.constant 0 : index
    %c0_0 = arith.constant 0 : index
    %0 = vector.load %arg1[%c0, %c0_0] : memref<1x2048xf32, #tpu.memory_space<vmem>>, vector<1x2048xf32>
    %cst = arith.constant 3.000000e+00 : f32
    %1 = vector.broadcast %cst : f32 to vector<1x2048xf32>
    %2 = arith.addf %0, %1 : vector<1x2048xf32>
    %cst_1 = arith.constant 0.000000e+00 : f32
    %cst_2 = arith.constant 6.000000e+00 : f32
    %3 = vector.broadcast %cst_1 : f32 to vector<1x2048xf32>
    %4 = arith.maximumf %3, %2 : vector<1x2048xf32>
    %5 = vector.broadcast %cst_2 : f32 to vector<1x2048xf32>
    %6 = arith.minimumf %5, %4 : vector<1x2048xf32>
    %7 = arith.mulf %0, %6 : vector<1x2048xf32>
    %cst_3 = arith.constant 0.166666672 : f32
    %8 = vector.broadcast %cst_3 : f32 to vector<1x2048xf32>
    %9 = arith.mulf %7, %8 : vector<1x2048xf32>
    %c0_4 = arith.constant 0 : index
    %c0_5 = arith.constant 0 : index
    %10 = vector.load %arg2[%c0_4, %c0_5] : memref<1x2048xf32, #tpu.memory_space<vmem>>, vector<1x2048xf32>
    tpu.vector_store %arg2[%c0_4, %c0_5], %9 {strides = array<i32>} : memref<1x2048xf32, #tpu.memory_space<vmem>>, vector<1x2048xf32>,
    return
  }
  func.func @transform_0(%arg0: i32) -> (i32, i32) {
    %c0_i32 = arith.constant 0 : i32
    %c0_i32_0 = arith.constant 0 : i32
    return %arg0, %c0_i32 : i32, i32
  }
  func.func @transform_1(%arg0: i32) -> (i32, i32) {
    %c0_i32 = arith.constant 0 : i32
    %c0_i32_0 = arith.constant 0 : i32
    return %arg0, %c0_i32 : i32, i32
  }
}

</mosaic_0001>

<llo_original>
// kernel: tpu_custom_call.1
$region0: #{tpu_custom_call.1}
  #allocation0 [shape = 'u32[]', space=smem, size = 0x4, offset = 0x4, fixed_abs, tag = 'smem constant byte address 0x4 - core index']
  #allocation1 [shape = 'u32[72,128]{1,0:T(1,128)}', space=vmem, size = 0x9000, scoped, tag = 'internal scratch']
  %s0 = inlined_call_operand.hbm [shape: f32[1,2048], index: 0, kind: input, shape index: {}]
  %s1 = inlined_call_operand.hbm [shape: f32[1,2048], index: 1, kind: output, shape index: {}]
  %s2 = sld [smem:[#allocation0]]
  $region18: #{tpu_custom_call.1} parent=0
    _
  %s4 = ssub.s32 1, %s2
  %s5 = scalar_select 0, %s4, %s2
  $region1: #{tpu_custom_call.1} parent=0
    #allocation2 [shape = 'u8[8192]{0}', space=vmem, size = 0x2000, scoped, tag = 'input window, operand 0, single buffered']
    #allocation3 [shape = 's32[1]{0}', space=sflag, size = 0x4, scoped, tag = 'scoped memory for tpu_custom_call.1']
    #allocation4 [shape = 's32[1]{0}', space=sflag, size = 0x4, scoped, tag = 'scoped memory for tpu_custom_call.1']
    #allocation5 [shape = 'u8[8192]{0}', space=vmem, size = 0x2000, scoped, tag = 'output window, operand 0, single buffered']
    %6 = vsyncpa [#allocation3], 0
    %7 = vsyncpa [#allocation4], 0
    // Predicated region
    $region2: #{tpu_custom_call.1} parent=1 // pred_check
      _
    $region3: #{tpu_custom_call.1} parent=1 // pred_check_branch
      %9 = sbr.rel (0) target = $region5
    $region4: #{tpu_custom_call.1} parent=1 // pred_region
      %11 = vsyncadd [#allocation3], 0
      %s13 = sshll.u32 %s0, 4
      %s14 = int_to_ptr.hbm [resolvable:$true] %s13
      %s15 = sshll.u32 [#allocation2], 4
      %s16 = int_to_ptr.vmem [resolvable:$true] %s15
      %18 = dma.hbm_to_vmem [thread:$0]  %s14, 256, %s16, [#allocation3]
    $region5: #{tpu_custom_call.1} parent=1 // pred_fallthru
      _
    // Predicated region
    $region6: #{tpu_custom_call.1} parent=1 // pred_check
      _
    $region7: #{tpu_custom_call.1} parent=1 // pred_check_branch
      %20 = sbr.rel (0) target = $region9
    $region8: #{tpu_custom_call.1} parent=1 // pred_region
      %22 = dma.done [#allocation3], 256
    $region9: #{tpu_custom_call.1} parent=1 // pred_fallthru
      _
    %v23 = vld [vmem:[#allocation2] sm:$0xff]
    %v24 = vld [vmem:[#allocation2 + $0x8] sm:$0xff]
    %v25 = vadd.f32 %v23, 3.0
    %v26 = vadd.f32 %v24, 3.0
    %v27 = vmax.f32 %v25, 0.0
    %v28 = vmax.f32 %v26, 0.0
    %v29 = vmin.f32 %v27, 6.0
    %v30 = vmin.f32 %v28, 6.0
    %v31 = vmul.f32 %v23, %v29
    %v32 = vmul.f32 %v24, %v30
    %v33 = vmul.f32 %v31, 0.16666667
    %v34 = vmul.f32 %v32, 0.16666667
    %35 = vst [vmem:[#allocation5] sm:$0xff] %v33
    %36 = vst [vmem:[#allocation5 + $0x8] sm:$0xff] %v34
    // Predicated region
    $region10: #{tpu_custom_call.1} parent=1 // pred_check
      _
    $region11: #{tpu_custom_call.1} parent=1 // pred_check_branch
      %38 = sbr.rel (0) target = $region13
    $region12: #{tpu_custom_call.1} parent=1 // pred_region
      %40 = vsyncadd [#allocation4], 0
      %s42 = sshll.u32 [#allocation5], 4
      %s43 = int_to_ptr.vmem [resolvable:$true] %s42
      %s44 = sshll.u32 %s1, 4
      %s45 = int_to_ptr.hbm [resolvable:$true] %s44
      %47 = dma.vmem_to_hbm [thread:$0]  %s43, 256, %s45, [#allocation4]
    $region13: #{tpu_custom_call.1} parent=1 // pred_fallthru
      _
    // Predicated region
    $region14: #{tpu_custom_call.1} parent=1 // pred_check
      _
    $region15: #{tpu_custom_call.1} parent=1 // pred_check_branch
      %49 = sbr.rel (0) target = $region17
    $region16: #{tpu_custom_call.1} parent=1 // pred_region
      %51 = dma.done [#allocation4], 256
    $region17: #{tpu_custom_call.1} parent=1 // pred_fallthru
      _
    %52 = vsyncpa [#allocation3], 1
    %53 = vsyncpa [#allocation4], 1

</llo_original>
